<compile_context>
chip_gen: v7x
topology: tpu7x:2x2x1
jax: 0.10.0
libtpu: 0.0.40
codegen_flags: <defaults>
</compile_context>

<pallas_src>
from functools import partial

import jax
import jax.numpy as jnp
from jax.experimental import pallas as pl
from jax.experimental.pallas import tpu as pltpu


# ----------------------------------------------------------------------------
# Pallas kernel: fused 3-layer GCN forward
# ----------------------------------------------------------------------------
def gnn_fused_kernel(a_ref, x_ref, w1_ref, b1_ref, w2_ref, b2_ref,
                     w3p_ref, b3p_ref, o_ref, *, normalize):
    a = a_ref[...]  # (N, N) bf16 normalized adjacency, resident for all layers

    def agg(z):
        # message passing: A_norm @ Z on the MXU, bf16 inputs, f32 accumulation
        return jnp.dot(a, z.astype(jnp.bfloat16), preferred_element_type=jnp.float32)

    def act(z):
        # ReLU -> dropout (identity in eval) -> F.normalize(p=2, dim=1), all in f32
        z = jnp.maximum(z, 0.0)
        # TODO(synk): F.dropout is identity in eval mode (training=False); a
        # training-mode kernel would use pltpu.prng_seed / prng_random_bits here.
        if normalize:
            sq = jnp.sum(z * z, axis=1, keepdims=True)
            # rsqrt on the EUP; clamp at 1e-24 == (1e-12)^2 matches F.normalize's eps
            z = z * jax.lax.rsqrt(jnp.maximum(sq, 1e-24))
        return z

    # Layer 1 (8 -> 32): f_in < f_out, aggregate first (N^2*8 + N*8*32 FLOPs)
    z = act(jnp.dot(agg(x_ref[...]), w1_ref[...],
                    preferred_element_type=jnp.float32) + b1_ref[...])
    # Layer 2 (32 -> 32): order is FLOP-neutral
    z = act(jnp.dot(agg(z), w2_ref[...],
                    preferred_element_type=jnp.float32) + b2_ref[...])
    # Layer 3 (32 -> 1, zero-padded to 128 lanes): no ReLU / dropout / normalize.
    # Aggregate the 32-wide activation first, then hit the lane-dense padded W so
    # the HBM store is a full-width unmasked vst.
    z = jnp.dot(agg(z), w3p_ref[...],
                preferred_element_type=jnp.float32) + b3p_ref[...]
    o_ref[...] = z.astype(o_ref.dtype)


def gnn_fused(a_norm_bf16, x, w1, b1, w2, b2, w3p, b3p, *, normalize=True):
    n = x.shape[0]
    lanes = w3p.shape[1]

    def full_spec(shape):
        return pl.BlockSpec(shape, lambda i, _s=shape: (0,) * len(_s))

    kernel = partial(gnn_fused_kernel, normalize=normalize)
    return pl.pallas_call(
        kernel,
        out_shape=jax.ShapeDtypeStruct((n, lanes), jnp.float32),
        grid=(1,),
        in_specs=[
            full_spec(a_norm_bf16.shape),  # A_norm (N, N) bf16
            full_spec(x.shape),            # X      (N, F0)
            full_spec(w1.shape), full_spec(b1.shape),
            full_spec(w2.shape), full_spec(b2.shape),
            full_spec(w3p.shape), full_spec(b3p.shape),
        ],
        out_specs=full_spec((n, lanes)),
        compiler_params=pltpu.CompilerParams(
            dimension_semantics=("arbitrary",)
        ),
    )(a_norm_bf16, x, w1, b1, w2, b2, w3p, b3p)


# ----------------------------------------------------------------------------
# Plain-JAX glue: GCN adjacency normalization, params, forward
# ----------------------------------------------------------------------------
def build_gcn_adjacency(edge_index, num_nodes):
    """Dense D^-1/2 (A + I) D^-1/2, message direction src -> dst (GCNConv norm).

    Duplicate edges are summed (scatter-add) and self-loops are only added for
    nodes that lack one, mirroring torch_geometric's gcn_norm /
    add_remaining_self_loops.
    """
    src, dst = edge_index[0], edge_index[1]
    a = jnp.zeros((num_nodes, num_nodes), jnp.float32).at[dst, src].add(1.0)
    diag = jnp.diagonal(a)
    a = a + jnp.diag(jnp.where(diag > 0, 0.0, 1.0))
    deg = jnp.sum(a, axis=1)
    d_inv_sqrt = jnp.where(deg > 0, jax.lax.rsqrt(jnp.maximum(deg, 1e-12)), 0.0)
    return d_inv_sqrt[:, None] * a * d_inv_sqrt[None, :]


def init_params(key, num_features, hidden_dim, num_layers):
    """Deterministic Glorot-ish init matching the module's layer in/out dims."""
    if num_layers == 1:
        dims = [(num_features, 1)]
    else:
        dims = [(num_features, hidden_dim)]
        for _ in range(num_layers - 2):
            dims.append((hidden_dim, hidden_dim))
        dims.append((hidden_dim, 1))  # jumping_knowledge is None here
    params = []
    for (f_in, f_out) in dims:
        key, kw, kb = jax.random.split(key, 3)
        scale = 1.0 / jnp.sqrt(jnp.float32(f_in))
        w = jax.random.uniform(kw, (f_in, f_out), jnp.float32, -scale, scale)
        b = jax.random.uniform(kb, (1, f_out), jnp.float32, -scale, scale)
        params.append((w, b))
    return params


def gnn_forward(x, edge_index, params, *, normalize=True, lanes=128):
    assert len(params) == 3, "fused kernel is specialized for num_layers=3"
    n = x.shape[0]
    # bf16 adjacency: halves the dominant HBM/DMA traffic at scale, MXU-native
    a_norm = build_gcn_adjacency(edge_index, n).astype(jnp.bfloat16)

    (w1, b1), (w2, b2), (w3, b3) = params
    f_out = w3.shape[1]
    # Zero-pad the final projection to 128 lanes for a lane-dense output store;
    # the real logits live in column 0 and are sliced out below.
    w3p = jnp.zeros((w3.shape[0], lanes), jnp.float32).at[:, :f_out].set(w3)
    b3p = jnp.zeros((1, lanes), jnp.float32).at[:, :f_out].set(b3)

    out_padded = gnn_fused(a_norm, x, w1, b1, w2, b2, w3p, b3p,
                           normalize=normalize)
    return out_padded[:, :f_out]  # (N, 1) logits


if __name__ == "__main__":
    key = jax.random.PRNGKey(0)
    num_nodes = 16
    num_features = 8
    hidden_dim = 32
    num_layers = 3
    num_edges = 32

    k_x, k_src, k_dst, k_params = jax.random.split(key, 4)
    x = jax.random.normal(k_x, (num_nodes, num_features), jnp.float32)
    src = jax.random.randint(k_src, (num_edges,), 0, num_nodes)
    dst = jax.random.randint(k_dst, (num_edges,), 0, num_nodes)
    # directed=False: store both directions, per the PyG undirected convention
    edge_index = jnp.stack(
        [jnp.concatenate([src, dst]), jnp.concatenate([dst, src])], axis=0
    )  # (2, 2E)
    edge_attr = jnp.ones((2 * num_edges, 1), jnp.float32)  # unused (use_edge_features=False)

    params = init_params(k_params, num_features, hidden_dim, num_layers)

    logits = gnn_forward(x, edge_index, params, normalize=True)
    jax.block_until_ready(logits)
    assert logits.shape == (num_nodes, 1)
    assert bool(jnp.all(jnp.isfinite(logits)))
    print("KERNEL_OK")
</pallas_src>

<mosaic_0001>
module attributes {stable_mosaic.version = 11 : i64} {
  func.func @gnn_fused_kernel(%arg0: i32, %arg1: memref<16x16xbf16, #tpu.memory_space<vmem>>, %arg2: memref<16x8xf32, #tpu.memory_space<vmem>>, %arg3: memref<8x32xf32, #tpu.memory_space<vmem>>, %arg4: memref<1x32xf32, #tpu.memory_space<vmem>>, %arg5: memref<32x32xf32, #tpu.memory_space<vmem>>, %arg6: memref<1x32xf32, #tpu.memory_space<vmem>>, %arg7: memref<32x128xf32, #tpu.memory_space<vmem>>, %arg8: memref<1x128xf32, #tpu.memory_space<vmem>>, %arg9: memref<16x128xf32, #tpu.memory_space<vmem>>) attributes {dimension_semantics = [#tpu.dimension_semantics<arbitrary>], iteration_bounds = array<i64: 1>, scalar_prefetch = 0 : i64, scratch_operands = 0 : i64, tpu.core_type = #tpu.core_type<tc>, window_params = [{pipeline_mode = #tpu.pipeline_mode<synchronous>, transform_indices = @transform_0, window_bounds = array<i64: 16, 16>}, {pipeline_mode = #tpu.pipeline_mode<synchronous>, transform_indices = @transform_1, window_bounds = array<i64: 16, 8>}, {pipeline_mode = #tpu.pipeline_mode<synchronous>, transform_indices = @transform_2, window_bounds = array<i64: 8, 32>}, {pipeline_mode = #tpu.pipeline_mode<synchronous>, transform_indices = @transform_3, window_bounds = array<i64: 1, 32>}, {pipeline_mode = #tpu.pipeline_mode<synchronous>, transform_indices = @transform_4, window_bounds = array<i64: 32, 32>}, {pipeline_mode = #tpu.pipeline_mode<synchronous>, transform_indices = @transform_5, window_bounds = array<i64: 1, 32>}, {pipeline_mode = #tpu.pipeline_mode<synchronous>, transform_indices = @transform_6, window_bounds = array<i64: 32, 128>}, {pipeline_mode = #tpu.pipeline_mode<synchronous>, transform_indices = @transform_7, window_bounds = array<i64: 1, 128>}, {pipeline_mode = #tpu.pipeline_mode<synchronous>, transform_indices = @transform_8, window_bounds = array<i64: 16, 128>}]} {
    %c0 = arith.constant 0 : index
    %c0_0 = arith.constant 0 : index
    %0 = vector.load %arg1[%c0, %c0_0] : memref<16x16xbf16, #tpu.memory_space<vmem>>, vector<16x16xbf16>
    %c0_1 = arith.constant 0 : index
    %c0_2 = arith.constant 0 : index
    %1 = vector.load %arg2[%c0_1, %c0_2] : memref<16x8xf32, #tpu.memory_space<vmem>>, vector<16x8xf32>
    %2 = arith.truncf %1 : vector<16x8xf32> to vector<16x8xbf16>
    %cst = arith.constant dense<0.000000e+00> : vector<16x8xf32>
    %3 = tpu.matmul %0, %2, %cst {dimension_numbers = #tpu.dot_dimension_numbers<[1], [0], [0], [1], [0, 0, 1, 1], [], []>} : vector<16x16xbf16>, vector<16x8xbf16>, vector<16x8xf32> -> vector<16x8xf32>
    %c0_3 = arith.constant 0 : index
    %c0_4 = arith.constant 0 : index
    %4 = vector.load %arg3[%c0_3, %c0_4] : memref<8x32xf32, #tpu.memory_space<vmem>>, vector<8x32xf32>
    %cst_5 = arith.constant dense<0.000000e+00> : vector<16x32xf32>
    %5 = tpu.matmul %3, %4, %cst_5 {dimension_numbers = #tpu.dot_dimension_numbers<[1], [0], [0], [1], [0, 0, 1, 1], [], []>} : vector<16x8xf32>, vector<8x32xf32>, vector<16x32xf32> -> vector<16x32xf32>
    %c0_6 = arith.constant 0 : index
    %c0_7 = arith.constant 0 : index
    %6 = vector.load %arg4[%c0_6, %c0_7] : memref<1x32xf32, #tpu.memory_space<vmem>>, vector<1x32xf32>
    %7 = vector.broadcast %6 : vector<1x32xf32> to vector<16x32xf32>
    %8 = arith.addf %5, %7 : vector<16x32xf32>
    %cst_8 = arith.constant 0.000000e+00 : f32
    %9 = vector.broadcast %cst_8 : f32 to vector<16x32xf32>
    %10 = arith.maximumf %8, %9 : vector<16x32xf32>
    %11 = arith.mulf %10, %10 : vector<16x32xf32>
    %cst_9 = arith.constant dense<0.000000e+00> : vector<16xf32>
    %12 = vector.multi_reduction <add>, %11, %cst_9 [1] : vector<16x32xf32> to vector<16xf32>
    %13 = vector.shape_cast %12 : vector<16xf32> to vector<16x1xf32>
    %cst_10 = arith.constant 1.000000e-24 : f32
    %14 = vector.broadcast %cst_10 : f32 to vector<16x1xf32>
    %15 = arith.maximumf %13, %14 : vector<16x1xf32>
    %16 = math.rsqrt %15 : vector<16x1xf32>
    %17 = vector.broadcast %16 : vector<16x1xf32> to vector<16x32xf32>
    %18 = arith.mulf %10, %17 : vector<16x32xf32>
    %19 = arith.truncf %18 : vector<16x32xf32> to vector<16x32xbf16>
    %cst_11 = arith.constant dense<0.000000e+00> : vector<16x32xf32>
    %20 = tpu.matmul %0, %19, %cst_11 {dimension_numbers = #tpu.dot_dimension_numbers<[1], [0], [0], [1], [0, 0, 1, 1], [], []>} : vector<16x16xbf16>, vector<16x32xbf16>, vector<16x32xf32> -> vector<16x32xf32>
    %c0_12 = arith.constant 0 : index
    %c0_13 = arith.constant 0 : index
    %21 = vector.load %arg5[%c0_12, %c0_13] : memref<32x32xf32, #tpu.memory_space<vmem>>, vector<32x32xf32>
    %cst_14 = arith.constant dense<0.000000e+00> : vector<16x32xf32>
    %22 = tpu.matmul %20, %21, %cst_14 {dimension_numbers = #tpu.dot_dimension_numbers<[1], [0], [0], [1], [0, 0, 1, 1], [], []>} : vector<16x32xf32>, vector<32x32xf32>, vector<16x32xf32> -> vector<16x32xf32>
    %c0_15 = arith.constant 0 : index
    %c0_16 = arith.constant 0 : index
    %23 = vector.load %arg6[%c0_15, %c0_16] : memref<1x32xf32, #tpu.memory_space<vmem>>, vector<1x32xf32>
    %24 = vector.broadcast %23 : vector<1x32xf32> to vector<16x32xf32>
    %25 = arith.addf %22, %24 : vector<16x32xf32>
    %cst_17 = arith.constant 0.000000e+00 : f32
    %26 = vector.broadcast %cst_17 : f32 to vector<16x32xf32>
    %27 = arith.maximumf %25, %26 : vector<16x32xf32>
    %28 = arith.mulf %27, %27 : vector<16x32xf32>
    %cst_18 = arith.constant dense<0.000000e+00> : vector<16xf32>
    %29 = vector.multi_reduction <add>, %28, %cst_18 [1] : vector<16x32xf32> to vector<16xf32>
    %30 = vector.shape_cast %29 : vector<16xf32> to vector<16x1xf32>
    %cst_19 = arith.constant 1.000000e-24 : f32
    %31 = vector.broadcast %cst_19 : f32 to vector<16x1xf32>
    %32 = arith.maximumf %30, %31 : vector<16x1xf32>
    %33 = math.rsqrt %32 : vector<16x1xf32>
    %34 = vector.broadcast %33 : vector<16x1xf32> to vector<16x32xf32>
    %35 = arith.mulf %27, %34 : vector<16x32xf32>
    %36 = arith.truncf %35 : vector<16x32xf32> to vector<16x32xbf16>
    %cst_20 = arith.constant dense<0.000000e+00> : vector<16x32xf32>
    %37 = tpu.matmul %0, %36, %cst_20 {dimension_numbers = #tpu.dot_dimension_numbers<[1], [0], [0], [1], [0, 0, 1, 1], [], []>} : vector<16x16xbf16>, vector<16x32xbf16>, vector<16x32xf32> -> vector<16x32xf32>
    %c0_21 = arith.constant 0 : index
    %c0_22 = arith.constant 0 : index
    %38 = vector.load %arg7[%c0_21, %c0_22] : memref<32x128xf32, #tpu.memory_space<vmem>>, vector<32x128xf32>
    %cst_23 = arith.constant dense<0.000000e+00> : vector<16x128xf32>
    %39 = tpu.matmul %37, %38, %cst_23 {dimension_numbers = #tpu.dot_dimension_numbers<[1], [0], [0], [1], [0, 0, 1, 1], [], []>} : vector<16x32xf32>, vector<32x128xf32>, vector<16x128xf32> -> vector<16x128xf32>
    %c0_24 = arith.constant 0 : index
    %c0_25 = arith.constant 0 : index
    %40 = vector.load %arg8[%c0_24, %c0_25] : memref<1x128xf32, #tpu.memory_space<vmem>>, vector<1x128xf32>
    %41 = vector.broadcast %40 : vector<1x128xf32> to vector<16x128xf32>
    %42 = arith.addf %39, %41 : vector<16x128xf32>
    %c0_26 = arith.constant 0 : index
    %c0_27 = arith.constant 0 : index
    %43 = vector.load %arg9[%c0_26, %c0_27] : memref<16x128xf32, #tpu.memory_space<vmem>>, vector<16x128xf32>
    tpu.vector_store %arg9[%c0_26, %c0_27], %42 {strides = array<i32>} : memref<16x128xf32, #tpu.memory_space<vmem>>, vector<16x128xf32>,
    return
  }
  func.func @transform_0(%arg0: i32) -> (i32, i32) {
    %c0_i32 = arith.constant 0 : i32
    %c0_i32_0 = arith.constant 0 : i32
    %c0_i32_1 = arith.constant 0 : i32
    return %c0_i32, %c0_i32_0 : i32, i32
  }
  func.func @transform_1(%arg0: i32) -> (i32, i32) {
    %c0_i32 = arith.constant 0 : i32
    %c0_i32_0 = arith.constant 0 : i32
    %c0_i32_1 = arith.constant 0 : i32
    return %c0_i32, %c0_i32_0 : i32, i32
  }
  func.func @transform_2(%arg0: i32) -> (i32, i32) {
    %c0_i32 = arith.constant 0 : i32
    %c0_i32_0 = arith.constant 0 : i32
    %c0_i32_1 = arith.constant 0 : i32
    return %c0_i32, %c0_i32_0 : i32, i32
  }
  func.func @transform_3(%arg0: i32) -> (i32, i32) {
    %c0_i32 = arith.constant 0 : i32
    %c0_i32_0 = arith.constant 0 : i32
    %c0_i32_1 = arith.constant 0 : i32
    return %c0_i32, %c0_i32_0 : i32, i32
  }
  func.func @transform_4(%arg0: i32) -> (i32, i32) {
    %c0_i32 = arith.constant 0 : i32
    %c0_i32_0 = arith.constant 0 : i32
    %c0_i32_1 = arith.constant 0 : i32
    return %c0_i32, %c0_i32_0 : i32, i32
  }
  func.func @transform_5(%arg0: i32) -> (i32, i32) {
    %c0_i32 = arith.constant 0 : i32
    %c0_i32_0 = arith.constant 0 : i32
    %c0_i32_1 = arith.constant 0 : i32
    return %c0_i32, %c0_i32_0 : i32, i32
  }
  func.func @transform_6(%arg0: i32) -> (i32, i32) {
    %c0_i32 = arith.constant 0 : i32
    %c0_i32_0 = arith.constant 0 : i32
    %c0_i32_1 = arith.constant 0 : i32
    return %c0_i32, %c0_i32_0 : i32, i32
  }
  func.func @transform_7(%arg0: i32) -> (i32, i32) {
    %c0_i32 = arith.constant 0 : i32
    %c0_i32_0 = arith.constant 0 : i32
    %c0_i32_1 = arith.constant 0 : i32
    return %c0_i32, %c0_i32_0 : i32, i32
  }
  func.func @transform_8(%arg0: i32) -> (i32, i32) {
    %c0_i32 = arith.constant 0 : i32
    %c0_i32_0 = arith.constant 0 : i32
    %c0_i32_1 = arith.constant 0 : i32
    return %c0_i32, %c0_i32_0 : i32, i32
  }
}

</mosaic_0001>

<llo_original>
// kernel: tpu_custom_call.1
$region0: #{tpu_custom_call.1}
  #allocation0 [shape = 'u32[]', space=smem, size = 0x4, offset = 0x4, fixed_abs, tag = 'smem constant byte address 0x4 - core index']
  #allocation1 [shape = 'u32[144,128]{1,0:T(1,128)}', space=vmem, size = 0x12000, scoped, tag = 'internal scratch']
  %s0 = inlined_call_operand.hbm [shape: bf16[16,16], index: 0, kind: input, shape index: {}]
  %s1 = inlined_call_operand.vmem [shape: f32[16,8], index: 1, kind: input, shape index: {}]
  %s2 = inlined_call_operand.hbm [shape: f32[8,32], index: 2, kind: input, shape index: {}]
  %s3 = inlined_call_operand.vmem [shape: f32[1,32], index: 3, kind: input, shape index: {}]
  %s4 = inlined_call_operand.vmem [shape: f32[32,32], index: 4, kind: input, shape index: {}]
  %s5 = inlined_call_operand.vmem [shape: f32[1,32], index: 5, kind: input, shape index: {}]
  %s6 = inlined_call_operand.hbm [shape: f32[32,128], index: 6, kind: input, shape index: {}]
  %s7 = inlined_call_operand.vmem [shape: f32[1,128], index: 7, kind: input, shape index: {}]
  %s8 = inlined_call_operand.hbm [shape: f32[16,128], index: 8, kind: output, shape index: {}]
  %s9 = sld [smem:[#allocation0]]
  $region54: #{tpu_custom_call.1} parent=0
    _
  %s11 = ssub.s32 1, %s9
  %s12 = scalar_select 0, %s11, %s9
  $region1: #{tpu_custom_call.1} parent=0
    #allocation2 [shape = 'u8[4096]{0}', space=vmem, size = 0x1000, scoped, tag = 'input window, operand 0, single buffered']
    #allocation3 [shape = 's32[1]{0}', space=sflag, size = 0x4, scoped, tag = 'scoped memory for tpu_custom_call.1']
    #allocation4 [shape = 's32[1]{0}', space=sflag, size = 0x4, scoped, tag = 'scoped memory for tpu_custom_call.1']
    #allocation5 [shape = 'u8[4096]{0}', space=vmem, size = 0x1000, scoped, tag = 'input window, operand 2, single buffered']
    #allocation6 [shape = 's32[1]{0}', space=sflag, size = 0x4, scoped, tag = 'scoped memory for tpu_custom_call.1']
    #allocation7 [shape = 'u8[16384]{0}', space=vmem, size = 0x4000, scoped, tag = 'input window, operand 6, single buffered']
    #allocation8 [shape = 'u8[8192]{0}', space=vmem, size = 0x2000, scoped, tag = 'output window, operand 0, single buffered']
    %13 = vsyncpa [#allocation3], 0
    %14 = vsyncpa [#allocation6], 0
    %15 = vsyncpa [#allocation4], 0
    // Predicated region
    $region2: #{tpu_custom_call.1} parent=1 // pred_check
      _
    $region3: #{tpu_custom_call.1} parent=1 // pred_check_branch
      %17 = sbr.rel (0) target = $region5
    $region4: #{tpu_custom_call.1} parent=1 // pred_region
      %s19 = ssub.s32 128, 128
      %20 = vsyncadd [#allocation3], %s19
      %s21 = sshll.u32 [#allocation2], 4
      %s22 = int_to_ptr.vmem [resolvable:$true] %s21
      %27 = dma.hbm_to_vmem [thread:$0]  %s0, 128, %s22, [#allocation3], 64, 64, 4
    $region5: #{tpu_custom_call.1} parent=1 // pred_fallthru
      _
    // Predicated region
    $region6: #{tpu_custom_call.1} parent=1 // pred_check
      _
    $region7: #{tpu_custom_call.1} parent=1 // pred_check_branch
      %29 = sbr.rel (0) target = $region9
    $region8: #{tpu_custom_call.1} parent=1 // pred_region
      _
    $region9: #{tpu_custom_call.1} parent=1 // pred_fallthru
      _
    // Predicated region
    $region10: #{tpu_custom_call.1} parent=1 // pred_check
      _
    $region11: #{tpu_custom_call.1} parent=1 // pred_check_branch
      %31 = sbr.rel (0) target = $region13
    $region12: #{tpu_custom_call.1} parent=1 // pred_region
      %s33 = ssub.s32 128, 128
      %34 = vsyncadd [#allocation6], %s33
      %s36 = sshll.u32 [#allocation5], 4
      %s37 = int_to_ptr.vmem [resolvable:$true] %s36
      %39 = dma.hbm_to_vmem [thread:$0]  %s2, 128, %s37, [#allocation6]
    $region13: #{tpu_custom_call.1} parent=1 // pred_fallthru
      _
    // Predicated region
    $region14: #{tpu_custom_call.1} parent=1 // pred_check
      _
    $region15: #{tpu_custom_call.1} parent=1 // pred_check_branch
      %41 = sbr.rel (0) target = $region17
    $region16: #{tpu_custom_call.1} parent=1 // pred_region
      _
    $region17: #{tpu_custom_call.1} parent=1 // pred_fallthru
      _
    // Predicated region
    $region18: #{tpu_custom_call.1} parent=1 // pred_check
      _
    $region19: #{tpu_custom_call.1} parent=1 // pred_check_branch
      %43 = sbr.rel (0) target = $region21
    $region20: #{tpu_custom_call.1} parent=1 // pred_region
      _
    $region21: #{tpu_custom_call.1} parent=1 // pred_fallthru
      _
    // Predicated region
    $region22: #{tpu_custom_call.1} parent=1 // pred_check
      _
    $region23: #{tpu_custom_call.1} parent=1 // pred_check_branch
      %45 = sbr.rel (0) target = $region25
    $region24: #{tpu_custom_call.1} parent=1 // pred_region
      _
    $region25: #{tpu_custom_call.1} parent=1 // pred_fallthru
      _
    // Predicated region
    $region26: #{tpu_custom_call.1} parent=1 // pred_check
      _
    $region27: #{tpu_custom_call.1} parent=1 // pred_check_branch
      %47 = sbr.rel (0) target = $region29
    $region28: #{tpu_custom_call.1} parent=1 // pred_region
      %s49 = ssub.s32 512, 512
      %50 = vsyncadd [#allocation6], %s49
      %s51 = sshll.u32 [#allocation7], 4
      %s52 = int_to_ptr.vmem [resolvable:$true] %s51
      %57 = dma.hbm_to_vmem [thread:$0]  %s6, 512, %s52, [#allocation6], 128, 128, 8
    $region29: #{tpu_custom_call.1} parent=1 // pred_fallthru
      _
    // Predicated region
    $region30: #{tpu_custom_call.1} parent=1 // pred_check
      _
    $region31: #{tpu_custom_call.1} parent=1 // pred_check_branch
      %59 = sbr.rel (0) target = $region33
    $region32: #{tpu_custom_call.1} parent=1 // pred_region
      _
    $region33: #{tpu_custom_call.1} parent=1 // pred_fallthru
      _
    // Predicated region
    $region34: #{tpu_custom_call.1} parent=1 // pred_check
      _
    $region35: #{tpu_custom_call.1} parent=1 // pred_check_branch
      %61 = sbr.rel (0) target = $region37
    $region36: #{tpu_custom_call.1} parent=1 // pred_region
      %62 = dma.done [#allocation3], 128
    $region37: #{tpu_custom_call.1} parent=1 // pred_fallthru
      _
    // Predicated region
    $region38: #{tpu_custom_call.1} parent=1 // pred_check
      _
    $region39: #{tpu_custom_call.1} parent=1 // pred_check_branch
      %64 = sbr.rel (0) target = $region41
    $region40: #{tpu_custom_call.1} parent=1 // pred_region
      %65 = dma.done [#allocation6], 128
    $region41: #{tpu_custom_call.1} parent=1 // pred_fallthru
      _
    // Predicated region
    $region42: #{tpu_custom_call.1} parent=1 // pred_check
      _
    $region43: #{tpu_custom_call.1} parent=1 // pred_check_branch
      %67 = sbr.rel (0) target = $region45
    $region44: #{tpu_custom_call.1} parent=1 // pred_region
      %68 = dma.done [#allocation6], 512
    $region45: #{tpu_custom_call.1} parent=1 // pred_fallthru
      _
    %v70 = vld [vmem:[#allocation2] sm:$0xf]
    %v71 = vld [vmem:[#allocation2 + $0x4] sm:$0xf]
    %v72 = vld [vmem:[%s1] sm:$0xff]
    %v73 = vld [vmem:[%s1 + $0x8] sm:$0xff]
    %v74 = vpack.c.bf16 %v73, %v72
    %v77 = vunpack.c.l.b16 %v70
    %v78 = vunpack.c.l.b16 %v71
    %v79 = vpack.c.b16 %v78, %v77
    %vm80 = vcmask 130048
    %v82 = vsel %vm80, %v79, 0
    %84 = vmatprep.subr.bf16.mxu0 0
    %85 = vmatpush1.bf16.msra.mxu0 %v74
    %86 = vmatprep.subr.bf16.mxu0 0
    %87 = vmatpush1.bf16.msra.mxu0 0
    %88 = vmatprep.subr.bf16.mxu0 0
    %89 = vmatpush1.bf16.msra.mxu0 0
    %90 = vmatprep.subr.bf16.mxu0 0
    %91 = vmatpush1.bf16.msra.mxu0 0
    %92 = vmatprep.subr.bf16.mxu0 0
    %93 = vmatpush1.bf16.msra.mxu0 0
    %94 = vmatprep.subr.bf16.mxu0 0
    %95 = vmatpush1.bf16.msra.mxu0 0
    %96 = vmatprep.subr.bf16.mxu0 0
    %97 = vmatpush1.bf16.msra.mxu0 0
    %98 = vmatprep.subr.bf16.mxu0 0
    %99 = vmatpush1.bf16.msra.mxu0 0
    %100 = vmatprep.subr.bf16.mxu0 0
    %101 = vmatpush1.bf16.msra.mxu0 0
    %102 = vmatprep.subr.bf16.mxu0 0
    %103 = vmatpush1.bf16.msra.mxu0 0
    %104 = vmatprep.subr.bf16.mxu0 0
    %105 = vmatpush1.bf16.msra.mxu0 0
    %106 = vmatprep.subr.bf16.mxu0 0
    %107 = vmatpush1.bf16.msra.mxu0 0
    %108 = vmatprep.subr.bf16.mxu0 0
    %109 = vmatpush1.bf16.msra.mxu0 0
    %110 = vmatprep.subr.bf16.mxu0 0
    %111 = vmatpush1.bf16.msra.mxu0 0
    %112 = vmatprep.subr.bf16.mxu0 0
    %113 = vmatpush1.bf16.msra.mxu0 0
    %114 = vmatprep.subr.bf16.mxu0 0
    %115 = vmatpush1.bf16.msra.mxu0 0
    %116 = vmatprep.mubr.bf16.mxu0 0
    %117 = vmatmul.mubr.bf16.gmra.mrb[0].mxu0 %v82
    %v118 = vpop.f32.mrb[0].mxu0
    %v119 = vadd.f32 0.0, %v118
    %v120 = vpop.f32.mrb[0].mxu0
    %v121 = vpop.f32.mrb[0].mxu0
    %v122 = vadd.f32 0.0, %v121
    %v123 = vpop.f32.mrb[0].mxu0
    %124 = vdwg.mxu0
    %v125 = vld [vmem:[#allocation5] sm:$0xff]
    %v126 = vld [vmem:[%s3] sm:$0x1]
    %v128 = vlaneseq
    %v129 = vshrl.u32 %v128, 7
    %v130 = vsub.s32 0, %v129
    %v131 = vrot.slane %v126, %v130
    %vm133 = vcmask 64512
    %v135 = vsel %vm133, %v119, 0
    %v138 = vsel %vm133, %v122, 0
    %140 = vmatprep.subr.mxu0 0.0
    %141 = vmatpush1.msra.mxu0 %v125
    %142 = vmatprep.subr.mxu0 0.0
    %143 = vmatpush1.msra.mxu0 0.0
    %144 = vmatprep.subr.mxu0 0.0
    %145 = vmatpush1.msra.mxu0 0.0
    %146 = vmatprep.subr.mxu0 0.0
    %147 = vmatpush1.msra.mxu0 0.0
    %148 = vmatprep.subr.mxu0 0.0
    %149 = vmatpush1.msra.mxu0 0.0
    %150 = vmatprep.subr.mxu0 0.0
    %151 = vmatpush1.msra.mxu0 0.0
    %152 = vmatprep.subr.mxu0 0.0
    %153 = vmatpush1.msra.mxu0 0.0
    %154 = vmatprep.subr.mxu0 0.0
    %155 = vmatpush1.msra.mxu0 0.0
    %156 = vmatprep.subr.mxu0 0.0
    %157 = vmatpush1.msra.mxu0 0.0
    %158 = vmatprep.subr.mxu0 0.0
    %159 = vmatpush1.msra.mxu0 0.0
    %160 = vmatprep.subr.mxu0 0.0
    %161 = vmatpush1.msra.mxu0 0.0
    %162 = vmatprep.subr.mxu0 0.0
    %163 = vmatpush1.msra.mxu0 0.0
    %164 = vmatprep.subr.mxu0 0.0
    %165 = vmatpush1.msra.mxu0 0.0
    %166 = vmatprep.subr.mxu0 0.0
    %167 = vmatpush1.msra.mxu0 0.0
    %168 = vmatprep.subr.mxu0 0.0
    %169 = vmatpush1.msra.mxu0 0.0
    %170 = vmatprep.subr.mxu0 0.0
    %171 = vmatpush1.msra.mxu0 0.0
    %172 = vmatprep.subr.mxu0 0.0
    %173 = vmatpush1.msra.mxu0 0.0
    %174 = vmatprep.subr.mxu0 0.0
    %175 = vmatpush1.msra.mxu0 0.0
    %176 = vmatprep.subr.mxu0 0.0
    %177 = vmatpush1.msra.mxu0 0.0
    %178 = vmatprep.subr.mxu0 0.0
    %179 = vmatpush1.msra.mxu0 0.0
    %180 = vmatprep.subr.mxu0 0.0
    %181 = vmatpush1.msra.mxu0 0.0
    %182 = vmatprep.subr.mxu0 0.0
    %183 = vmatpush1.msra.mxu0 0.0
    %184 = vmatprep.subr.mxu0 0.0
    %185 = vmatpush1.msra.mxu0 0.0
    %186 = vmatprep.subr.mxu0 0.0
    %187 = vmatpush1.msra.mxu0 0.0
    %188 = vmatprep.subr.mxu0 0.0
    %189 = vmatpush1.msra.mxu0 0.0
    %190 = vmatprep.subr.mxu0 0.0
    %191 = vmatpush1.msra.mxu0 0.0
    %192 = vmatprep.subr.mxu0 0.0
    %193 = vmatpush1.msra.mxu0 0.0
    %194 = vmatprep.subr.mxu0 0.0
    %195 = vmatpush1.msra.mxu0 0.0
    %196 = vmatprep.subr.mxu0 0.0
    %197 = vmatpush1.msra.mxu0 0.0
    %198 = vmatprep.subr.mxu0 0.0
    %199 = vmatpush1.msra.mxu0 0.0
    %200 = vmatprep.subr.mxu0 0.0
    %201 = vmatpush1.msra.mxu0 0.0
    %202 = vmatprep.subr.mxu0 0.0
    %203 = vmatpush1.msra.mxu0 0.0
    %204 = vmatprep.mubr.f32.mxu0 0.0
    %205 = vmatmul.mubr.f32.gmra.mrb[0].mxu0 %v135
    %v206 = vpop.f32.mrb[0].mxu0
    %v207 = vadd.f32 %v131, %v206
    %v208 = vpop.f32.mrb[0].mxu0
    %209 = vmatprep.mubr.f32.mxu0 0.0
    %210 = vmatmul.mubr.f32.gmra.mrb[0].mxu0 %v138
    %v211 = vpop.f32.mrb[0].mxu0
    %v212 = vadd.f32 %v131, %v211
    %v213 = vpop.f32.mrb[0].mxu0
    %214 = vdwg.mxu0
    %v215 = vmax.f32 %v207, 0.0
    %v216 = vmax.f32 %v212, 0.0
    %v217 = vmul.f32 %v215, %v215
    %v218 = vmul.f32 %v216, %v216
    %vm219 = vcmask 261120
    %v220 = vsel %vm219, %v217, 0.0
    %221 = vadd.xlane.f32.xlu0 %v220
    %v222 = vpop.xlane.xlu0 %221
    %v223 = vsel %vm219, %v218, 0.0
    %224 = vadd.xlane.f32.xlu0 %v223
    %v225 = vpop.xlane.xlu0 %224
    %v226 = vmax.f32 %v222, 1e-24
    %v227 = vmax.f32 %v225, 1e-24
    %v228 = vrsqrt.pop %v226
    %v229 = vrsqrt.pop %v227
    %v230 = vmul.f32 %v215, %v228
    %v231 = vmul.f32 %v216, %v229
    %v232 = vpack.c.bf16 %v231, %v230
    %233 = vmatprep.subr.bf16.mxu0 0
    %234 = vmatpush1.bf16.msra.mxu0 %v232
    %235 = vmatprep.subr.bf16.mxu0 0
    %236 = vmatpush1.bf16.msra.mxu0 0
    %237 = vmatprep.subr.bf16.mxu0 0
    %238 = vmatpush1.bf16.msra.mxu0 0
    %239 = vmatprep.subr.bf16.mxu0 0
    %240 = vmatpush1.bf16.msra.mxu0 0
    %241 = vmatprep.subr.bf16.mxu0 0
    %242 = vmatpush1.bf16.msra.mxu0 0
    %243 = vmatprep.subr.bf16.mxu0 0
    %244 = vmatpush1.bf16.msra.mxu0 0
    %245 = vmatprep.subr.bf16.mxu0 0
    %246 = vmatpush1.bf16.msra.mxu0 0
    %247 = vmatprep.subr.bf16.mxu0 0
    %248 = vmatpush1.bf16.msra.mxu0 0
    %249 = vmatprep.subr.bf16.mxu0 0
    %250 = vmatpush1.bf16.msra.mxu0 0
    %251 = vmatprep.subr.bf16.mxu0 0
    %252 = vmatpush1.bf16.msra.mxu0 0
    %253 = vmatprep.subr.bf16.mxu0 0
    %254 = vmatpush1.bf16.msra.mxu0 0
    %255 = vmatprep.subr.bf16.mxu0 0
    %256 = vmatpush1.bf16.msra.mxu0 0
    %257 = vmatprep.subr.bf16.mxu0 0
    %258 = vmatpush1.bf16.msra.mxu0 0
    %259 = vmatprep.subr.bf16.mxu0 0
    %260 = vmatpush1.bf16.msra.mxu0 0
    %261 = vmatprep.subr.bf16.mxu0 0
    %262 = vmatpush1.bf16.msra.mxu0 0
    %263 = vmatprep.subr.bf16.mxu0 0
    %264 = vmatpush1.bf16.msra.mxu0 0
    %265 = vmatprep.mubr.bf16.mxu0 0
    %266 = vmatmul.mubr.bf16.gmra.mrb[0].mxu0 %v82
    %v267 = vpop.f32.mrb[0].mxu0
    %v268 = vadd.f32 0.0, %v267
    %v269 = vpop.f32.mrb[0].mxu0
    %v270 = vpop.f32.mrb[0].mxu0
    %v271 = vadd.f32 0.0, %v270
    %v272 = vpop.f32.mrb[0].mxu0
    %273 = vdwg.mxu0
    %v274 = vld [vmem:[%s4] sm:$0xff]
    %v275 = vld [vmem:[%s4 + $0x8] sm:$0xff]
    %v276 = vld [vmem:[%s4 + $0x10] sm:$0xff]
    %v277 = vld [vmem:[%s4 + $0x18] sm:$0xff]
    %v278 = vld [vmem:[%s5] sm:$0x1]
    %v280 = vlaneseq
    %v281 = vshrl.u32 %v280, 7
    %v282 = vsub.s32 0, %v281
    %v283 = vrot.slane %v278, %v282
    %v286 = vsel %vm219, %v268, 0
    %v289 = vsel %vm219, %v271, 0
    %291 = vmatprep.subr.mxu0 0.0
    %292 = vmatpush1.msra.mxu0 %v274
    %293 = vmatprep.subr.mxu0 0.0
    %294 = vmatpush1.msra.mxu0 %v275
    %295 = vmatprep.subr.mxu0 0.0
    %296 = vmatpush1.msra.mxu0 %v276
    %297 = vmatprep.subr.mxu0 0.0
    %298 = vmatpush1.msra.mxu0 %v277
    %299 = vmatprep.subr.mxu0 0.0
    %300 = vmatpush1.msra.mxu0 0.0
    %301 = vmatprep.subr.mxu0 0.0
    %302 = vmatpush1.msra.mxu0 0.0
    %303 = vmatprep.subr.mxu0 0.0
    %304 = vmatpush1.msra.mxu0 0.0
    %305 = vmatprep.subr.mxu0 0.0
    %306 = vmatpush1.msra.mxu0 0.0
    %307 = vmatprep.subr.mxu0 0.0
    %308 = vmatpush1.msra.mxu0 0.0
    %309 = vmatprep.subr.mxu0 0.0
    %310 = vmatpush1.msra.mxu0 0.0
    %311 = vmatprep.subr.mxu0 0.0
    %312 = vmatpush1.msra.mxu0 0.0
    %313 = vmatprep.subr.mxu0 0.0
    %314 = vmatpush1.msra.mxu0 0.0
    %315 = vmatprep.subr.mxu0 0.0
    %316 = vmatpush1.msra.mxu0 0.0
    %317 = vmatprep.subr.mxu0 0.0
    %318 = vmatpush1.msra.mxu0 0.0
    %319 = vmatprep.subr.mxu0 0.0
    %320 = vmatpush1.msra.mxu0 0.0
    %321 = vmatprep.subr.mxu0 0.0
    %322 = vmatpush1.msra.mxu0 0.0
    %323 = vmatprep.subr.mxu0 0.0
    %324 = vmatpush1.msra.mxu0 0.0
    %325 = vmatprep.subr.mxu0 0.0
    %326 = vmatpush1.msra.mxu0 0.0
    %327 = vmatprep.subr.mxu0 0.0
    %328 = vmatpush1.msra.mxu0 0.0
    %329 = vmatprep.subr.mxu0 0.0
    %330 = vmatpush1.msra.mxu0 0.0
    %331 = vmatprep.subr.mxu0 0.0
    %332 = vmatpush1.msra.mxu0 0.0
    %333 = vmatprep.subr.mxu0 0.0
    %334 = vmatpush1.msra.mxu0 0.0
    %335 = vmatprep.subr.mxu0 0.0
    %336 = vmatpush1.msra.mxu0 0.0
    %337 = vmatprep.subr.mxu0 0.0
    %338 = vmatpush1.msra.mxu0 0.0
    %339 = vmatprep.subr.mxu0 0.0
    %340 = vmatpush1.msra.mxu0 0.0
    %341 = vmatprep.subr.mxu0 0.0
    %342 = vmatpush1.msra.mxu0 0.0
    %343 = vmatprep.subr.mxu0 0.0
    %344 = vmatpush1.msra.mxu0 0.0
    %345 = vmatprep.subr.mxu0 0.0
    %346 = vmatpush1.msra.mxu0 0.0
    %347 = vmatprep.subr.mxu0 0.0
    %348 = vmatpush1.msra.mxu0 0.0
    %349 = vmatprep.subr.mxu0 0.0
    %350 = vmatpush1.msra.mxu0 0.0
    %351 = vmatprep.subr.mxu0 0.0
    %352 = vmatpush1.msra.mxu0 0.0
    %353 = vmatprep.subr.mxu0 0.0
    %354 = vmatpush1.msra.mxu0 0.0
    %355 = vmatprep.mubr.f32.mxu0 0.0
    %356 = vmatmul.mubr.f32.gmra.mrb[0].mxu0 %v286
    %v357 = vpop.f32.mrb[0].mxu0
    %v358 = vadd.f32 %v283, %v357
    %v359 = vpop.f32.mrb[0].mxu0
    %360 = vmatprep.mubr.f32.mxu0 0.0
    %361 = vmatmul.mubr.f32.gmra.mrb[0].mxu0 %v289
    %v362 = vpop.f32.mrb[0].mxu0
    %v363 = vadd.f32 %v283, %v362
    %v364 = vpop.f32.mrb[0].mxu0
    %365 = vdwg.mxu0
    %v366 = vmax.f32 %v358, 0.0
    %v367 = vmax.f32 %v363, 0.0
    %v368 = vmul.f32 %v366, %v366
    %v369 = vmul.f32 %v367, %v367
    %v370 = vsel %vm219, %v368, 0.0
    %371 = vadd.xlane.f32.xlu0 %v370
    %v372 = vpop.xlane.xlu0 %371
    %v373 = vsel %vm219, %v369, 0.0
    %374 = vadd.xlane.f32.xlu0 %v373
    %v375 = vpop.xlane.xlu0 %374
    %v376 = vmax.f32 %v372, 1e-24
    %v377 = vmax.f32 %v375, 1e-24
    %v378 = vrsqrt.pop %v376
    %v379 = vrsqrt.pop %v377
    %v380 = vmul.f32 %v366, %v378
    %v381 = vmul.f32 %v367, %v379
    %v382 = vpack.c.bf16 %v381, %v380
    %383 = vmatprep.subr.bf16.mxu0 0
    %384 = vmatpush1.bf16.msra.mxu0 %v382
    %385 = vmatprep.subr.bf16.mxu0 0
    %386 = vmatpush1.bf16.msra.mxu0 0
    %387 = vmatprep.subr.bf16.mxu0 0
    %388 = vmatpush1.bf16.msra.mxu0 0
    %389 = vmatprep.subr.bf16.mxu0 0
    %390 = vmatpush1.bf16.msra.mxu0 0
    %391 = vmatprep.subr.bf16.mxu0 0
    %392 = vmatpush1.bf16.msra.mxu0 0
    %393 = vmatprep.subr.bf16.mxu0 0
    %394 = vmatpush1.bf16.msra.mxu0 0
    %395 = vmatprep.subr.bf16.mxu0 0
    %396 = vmatpush1.bf16.msra.mxu0 0
    %397 = vmatprep.subr.bf16.mxu0 0
    %398 = vmatpush1.bf16.msra.mxu0 0
    %399 = vmatprep.subr.bf16.mxu0 0
    %400 = vmatpush1.bf16.msra.mxu0 0
    %401 = vmatprep.subr.bf16.mxu0 0
    %402 = vmatpush1.bf16.msra.mxu0 0
    %403 = vmatprep.subr.bf16.mxu0 0
    %404 = vmatpush1.bf16.msra.mxu0 0
    %405 = vmatprep.subr.bf16.mxu0 0
    %406 = vmatpush1.bf16.msra.mxu0 0
    %407 = vmatprep.subr.bf16.mxu0 0
    %408 = vmatpush1.bf16.msra.mxu0 0
    %409 = vmatprep.subr.bf16.mxu0 0
    %410 = vmatpush1.bf16.msra.mxu0 0
    %411 = vmatprep.subr.bf16.mxu0 0
    %412 = vmatpush1.bf16.msra.mxu0 0
    %413 = vmatprep.subr.bf16.mxu0 0
    %414 = vmatpush1.bf16.msra.mxu0 0
    %415 = vmatprep.mubr.bf16.mxu0 0
    %416 = vmatmul.mubr.bf16.gmra.mrb[0].mxu0 %v82
    %v417 = vpop.f32.mrb[0].mxu0
    %v418 = vadd.f32 0.0, %v417
    %v419 = vpop.f32.mrb[0].mxu0
    %v420 = vpop.f32.mrb[0].mxu0
    %v421 = vadd.f32 0.0, %v420
    %v422 = vpop.f32.mrb[0].mxu0
    %423 = vdwg.mxu0
    %v424 = vld [vmem:[#allocation7] sm:$0xff]
    %v425 = vld [vmem:[#allocation7 + $0x8] sm:$0xff]
    %v426 = vld [vmem:[#allocation7 + $0x10] sm:$0xff]
    %v427 = vld [vmem:[#allocation7 + $0x18] sm:$0xff]
    %v428 = vld [vmem:[%s7] sm:$0x1]
    %v430 = vlaneseq
    %v431 = vshrl.u32 %v430, 7
    %v432 = vsub.s32 0, %v431
    %v433 = vrot.slane %v428, %v432
    %v436 = vsel %vm219, %v418, 0
    %v439 = vsel %vm219, %v421, 0
    %441 = vmatprep.subr.mxu0 0.0
    %442 = vmatpush1.msra.mxu0 %v424
    %443 = vmatprep.subr.mxu0 0.0
    %444 = vmatpush1.msra.mxu0 %v425
    %445 = vmatprep.subr.mxu0 0.0
    %446 = vmatpush1.msra.mxu0 %v426
    %447 = vmatprep.subr.mxu0 0.0
    %448 = vmatpush1.msra.mxu0 %v427
    %449 = vmatprep.subr.mxu0 0.0
    %450 = vmatpush1.msra.mxu0 0.0
    %451 = vmatprep.subr.mxu0 0.0
    %452 = vmatpush1.msra.mxu0 0.0
    %453 = vmatprep.subr.mxu0 0.0
    %454 = vmatpush1.msra.mxu0 0.0
    %455 = vmatprep.subr.mxu0 0.0
    %456 = vmatpush1.msra.mxu0 0.0
    %457 = vmatprep.subr.mxu0 0.0
    %458 = vmatpush1.msra.mxu0 0.0
    %459 = vmatprep.subr.mxu0 0.0
    %460 = vmatpush1.msra.mxu0 0.0
    %461 = vmatprep.subr.mxu0 0.0
    %462 = vmatpush1.msra.mxu0 0.0
    %463 = vmatprep.subr.mxu0 0.0
    %464 = vmatpush1.msra.mxu0 0.0
    %465 = vmatprep.subr.mxu0 0.0
    %466 = vmatpush1.msra.mxu0 0.0
    %467 = vmatprep.subr.mxu0 0.0
    %468 = vmatpush1.msra.mxu0 0.0
    %469 = vmatprep.subr.mxu0 0.0
    %470 = vmatpush1.msra.mxu0 0.0
    %471 = vmatprep.subr.mxu0 0.0
    %472 = vmatpush1.msra.mxu0 0.0
    %473 = vmatprep.subr.mxu0 0.0
    %474 = vmatpush1.msra.mxu0 0.0
    %475 = vmatprep.subr.mxu0 0.0
    %476 = vmatpush1.msra.mxu0 0.0
    %477 = vmatprep.subr.mxu0 0.0
    %478 = vmatpush1.msra.mxu0 0.0
    %479 = vmatprep.subr.mxu0 0.0
    %480 = vmatpush1.msra.mxu0 0.0
    %481 = vmatprep.subr.mxu0 0.0
    %482 = vmatpush1.msra.mxu0 0.0
    %483 = vmatprep.subr.mxu0 0.0
    %484 = vmatpush1.msra.mxu0 0.0
    %485 = vmatprep.subr.mxu0 0.0
    %486 = vmatpush1.msra.mxu0 0.0
    %487 = vmatprep.subr.mxu0 0.0
    %488 = vmatpush1.msra.mxu0 0.0
    %489 = vmatprep.subr.mxu0 0.0
    %490 = vmatpush1.msra.mxu0 0.0
    %491 = vmatprep.subr.mxu0 0.0
    %492 = vmatpush1.msra.mxu0 0.0
    %493 = vmatprep.subr.mxu0 0.0
    %494 = vmatpush1.msra.mxu0 0.0
    %495 = vmatprep.subr.mxu0 0.0
    %496 = vmatpush1.msra.mxu0 0.0
    %497 = vmatprep.subr.mxu0 0.0
    %498 = vmatpush1.msra.mxu0 0.0
    %499 = vmatprep.subr.mxu0 0.0
    %500 = vmatpush1.msra.mxu0 0.0
    %501 = vmatprep.subr.mxu0 0.0
    %502 = vmatpush1.msra.mxu0 0.0
    %503 = vmatprep.subr.mxu0 0.0
    %504 = vmatpush1.msra.mxu0 0.0
    %505 = vmatprep.mubr.f32.mxu0 0.0
    %506 = vmatmul.mubr.f32.gmra.mrb[0].mxu0 %v436
    %v507 = vpop.f32.mrb[0].mxu0
    %v508 = vadd.f32 %v433, %v507
    %v509 = vpop.f32.mrb[0].mxu0
    %510 = vmatprep.mubr.f32.mxu0 0.0
    %511 = vmatmul.mubr.f32.gmra.mrb[0].mxu0 %v439
    %v512 = vpop.f32.mrb[0].mxu0
    %v513 = vadd.f32 %v433, %v512
    %v514 = vpop.f32.mrb[0].mxu0
    %515 = vdwg.mxu0
    %516 = vst [vmem:[#allocation8] sm:$0xff] %v508
    %517 = vst [vmem:[#allocation8 + $0x8] sm:$0xff] %v513
    // Predicated region
    $region46: #{tpu_custom_call.1} parent=1 // pred_check
      _
    $region47: #{tpu_custom_call.1} parent=1 // pred_check_branch
      %519 = sbr.rel (0) target = $region49
    $region48: #{tpu_custom_call.1} parent=1 // pred_region
      %s521 = ssub.s32 256, 256
      %522 = vsyncadd [#allocation4], %s521
      %s523 = sshll.u32 [#allocation8], 4
      %s524 = int_to_ptr.vmem [resolvable:$true] %s523
      %529 = dma.vmem_to_hbm [thread:$0]  %s524, 256, %s8, [#allocation4], 128, 128, 8
    $region49: #{tpu_custom_call.1} parent=1 // pred_fallthru
      _
    // Predicated region
    $region50: #{tpu_custom_call.1} parent=1 // pred_check
      _
    $region51: #{tpu_custom_call.1} parent=1 // pred_check_branch
      %531 = sbr.rel (0) target = $region53
    $region52: #{tpu_custom_call.1} parent=1 // pred_region
      %532 = dma.done [#allocation4], 256
    $region53: #{tpu_custom_call.1} parent=1 // pred_fallthru
      _
    %533 = vsyncpa [#allocation3], 1
    %534 = vsyncpa [#allocation6], 1
    %535 = vsyncpa [#allocation4], 1

</llo_original>
